<compile_context>
chip_gen: v6e
topology: v6e:2x2x1
jax: 0.10.0
libtpu: 0.0.40
codegen_flags: <defaults>
</compile_context>

<pallas_src>
import jax
import jax.numpy as jnp
from jax.experimental import pallas as pl
from jax.experimental.pallas import tpu as pltpu

OCP = 128    # conv output channels, zero-padded to a full lane register
CLSP = 128   # classes, zero-padded to a full lane register


def _fused_conv_pool_linear_kernel(p_ref, wc_ref, bc_ref, wl_ref, bl_ref,
                                   o_ref, pool_acc):
    """Conv3x3(SAME) as ONE matmul + bias + ReLU + partial GlobalAvgPool;
    the Linear epilogue runs only on the last row tile.

    p_ref   : (1, tile_m, kdim) bf16  lane-packed conv patches (kdim = k*k*C)
    wc_ref  : (kdim, OCP)       bf16  conv weight, contraction order (di,dj,c)
    bc_ref  : (1, OCP)          f32   conv bias (lane padded)
    wl_ref  : (OCP, CLSP)       f32   linear weight, pre-scaled by 1/(H*W)
    bl_ref  : (1, CLSP)         f32   linear bias (lane padded)
    o_ref   : (1, 8, CLSP)      f32   logits block, written once (last tile)
    pool_acc: (8, OCP)          f32   VMEM scratch: pooled-sum accumulator
    """
    ht = pl.program_id(1)
    tile_m = p_ref.shape[1]

    @pl.when(ht == 0)
    def _init():
        pool_acc[...] = jnp.zeros_like(pool_acc)

    # --- Conv2d(3x3, SAME) over this row tile: ONE bf16 MXU matmul, f32 acc.
    acc = jnp.dot(p_ref[0], wc_ref[...],
                  preferred_element_type=jnp.float32)             # (tile_m, OCP)
    h = jnp.maximum(acc + bc_ref[...], 0.0)                       # bias + ReLU (f32 VPU)

    # --- partial GlobalAvgPool: fold this tile's rows into 8 sublane partials
    # (leading-axis reduce == straight VPU vreg adds, no XLU).
    if tile_m % 8 == 0:
        pool_acc[...] += jnp.sum(h.reshape(tile_m // 8, 8, OCP), axis=0)
    else:
        pool_acc[0:1, :] += jnp.sum(h, axis=0, keepdims=True)

    # --- deferred Linear epilogue: one tiny matmul + single lane-dense store.
    @pl.when(ht == pl.num_programs(1) - 1)
    def _fin():
        logits8 = jnp.dot(pool_acc[...], wl_ref[...],
                          preferred_element_type=jnp.float32)     # (8, CLSP)
        logits = jnp.sum(logits8, axis=0, keepdims=True) + bl_ref[...]  # (1, CLSP)
        o_ref[...] = jnp.broadcast_to(logits, (8, CLSP))[None]


class PallasModel:
    """Pallas analogue of deep_architect PyTorchModel: dict of named inputs ->
    dict of named outputs, with the compiled evaluation path cached on first
    forward (mirrors PyTorchModel._module_seq caching)."""

    def __init__(self, params, num_classes=10, k=3):
        self.params = params
        self.num_classes = num_classes
        self.k = k
        self._compiled = None          # analogue of the cached _module_seq
        self._compiled_shape = None

    def __call__(self, input_name_to_val):
        return self.forward(input_name_to_val)

    def forward(self, input_name_to_val):
        x = input_name_to_val["in"]                           # [N, C, H, W] float32
        if self._compiled is None or self._compiled_shape != x.shape:
            self._compiled = self._build_forward(*x.shape)
            self._compiled_shape = x.shape
        logits = self._compiled(x, self.params["conv_w"], self.params["conv_b"],
                                self.params["lin_w"], self.params["lin_b"])
        return {"out": logits}

    def _build_forward(self, n, c, h, w):
        k = self.k
        pad = k // 2
        oc = int(self.params["conv_w"].shape[0])
        ncls = int(self.params["lin_w"].shape[0])
        kdim = k * k * c

        # Row-tile pick: prefer the whole image (1 grid step / batch); cap the
        # tile so the f32 (tile_m, 128) conv activation + double-buffered
        # patch tiles stay comfortably inside v7x's 64 MiB VMEM.
        max_tile_m = 2048
        th = h
        if h * w > max_tile_m:
            th = h
            for cand in range(h - 1, 0, -1):
                if h % cand == 0 and cand * w <= max_tile_m and (cand * w) % 8 == 0:
                    th = cand
                    break
        nht = h // th
        tile_m = th * w

        def fwd(x, conv_w, conv_b, lin_w, lin_b):
            # ---- wrapper layout plumbing: bf16 BEFORE pad/pack, lane-dense
            # ---- (k*k*C)-wide contraction slab (pairs with the single matmul).
            x_nhwc = jnp.transpose(x, (0, 2, 3, 1)).astype(jnp.bfloat16)
            x_pad = jnp.pad(x_nhwc, ((0, 0), (pad, pad), (pad, pad), (0, 0)))
            patches = jnp.concatenate(
                [x_pad[:, di:di + h, dj:dj + w, :]
                 for di in range(k) for dj in range(k)],
                axis=-1)                                          # (N, H, W, k*k*C)
            patches = patches.reshape(n, h * w, kdim)

            # conv weights (OC,C,K,K) -> (K,K,C,OC) -> (kdim, OCP), bf16
            wc = jnp.transpose(conv_w, (2, 3, 1, 0)).reshape(kdim, oc)
            wc = jnp.pad(wc, ((0, 0), (0, OCP - oc))).astype(jnp.bfloat16)
            bc = jnp.pad(conv_b, (0, OCP - oc)).astype(jnp.float32).reshape(1, OCP)

            # linear (NCLS, OC) -> (OCP, CLSP) f32; fold 1/(H*W) pool scale in
            wl = jnp.pad(lin_w.T, ((0, OCP - oc), (0, CLSP - ncls))).astype(jnp.float32)
            wl = wl * (1.0 / float(h * w))
            bl = jnp.pad(lin_b, (0, CLSP - ncls)).astype(jnp.float32).reshape(1, CLSP)

            out = pl.pallas_call(
                _fused_conv_pool_linear_kernel,
                out_shape=jax.ShapeDtypeStruct((n, 8, CLSP), jnp.float32),
                grid=(n, nht),
                in_specs=[
                    pl.BlockSpec((1, tile_m, kdim), lambda b, t: (b, t, 0)),
                    pl.BlockSpec((kdim, OCP), lambda b, t: (0, 0)),
                    pl.BlockSpec((1, OCP), lambda b, t: (0, 0)),
                    pl.BlockSpec((OCP, CLSP), lambda b, t: (0, 0)),
                    pl.BlockSpec((1, CLSP), lambda b, t: (0, 0)),
                ],
                out_specs=pl.BlockSpec((1, 8, CLSP), lambda b, t: (b, 0, 0)),
                scratch_shapes=[pltpu.VMEM((8, OCP), jnp.float32)],
                compiler_params=pltpu.CompilerParams(
                    dimension_semantics=("parallel", "arbitrary"),
                    vmem_limit_bytes=32 * 1024 * 1024),
            )(patches, wc, bc, wl, bl)

            return out[:, 0, :ncls]                      # strip lane/sublane padding

        return jax.jit(fwd)


# ----------------------------------------------------------------------------
# Pure-JAX reference with the SAME quantisation points as the kernel:
# conv operands rounded to bf16 (products accumulate in f32); bias / ReLU /
# pool and the linear layer stay f32.
# ----------------------------------------------------------------------------
def _reference(x, params):
    wc = params["conv_w"].astype(jnp.bfloat16).astype(jnp.float32)
    xq = x.astype(jnp.bfloat16).astype(jnp.float32)
    y = jax.lax.conv_general_dilated(
        xq, wc, window_strides=(1, 1), padding="SAME",
        dimension_numbers=("NCHW", "OIHW", "NCHW"),
        precision=jax.lax.Precision.HIGHEST)
    y = jnp.maximum(y + params["conv_b"][None, :, None, None], 0.0)
    pooled = jnp.mean(y, axis=(2, 3))                               # [N, OC]
    return jnp.matmul(pooled, params["lin_w"].T,
                      precision=jax.lax.Precision.HIGHEST) + params["lin_b"]


if __name__ == "__main__":
    N, C, H, W = 2, 4, 16, 16
    OC, NUM_CLASSES, K = 8, 10, 3

    key = jax.random.PRNGKey(0)
    kx, kcw, kcb, klw, klb = jax.random.split(key, 5)
    x = jax.random.normal(kx, (N, C, H, W), dtype=jnp.float32)

    params = {
        "conv_w": 0.1 * jax.random.normal(kcw, (OC, C, K, K), dtype=jnp.float32),
        "conv_b": 0.1 * jax.random.normal(kcb, (OC,), dtype=jnp.float32),
        "lin_w": 0.1 * jax.random.normal(klw, (NUM_CLASSES, OC), dtype=jnp.float32),
        "lin_b": 0.1 * jax.random.normal(klb, (NUM_CLASSES,), dtype=jnp.float32),
    }

    model = PallasModel(params, num_classes=NUM_CLASSES, k=K)
    out = model({"in": x})                       # dict-in / dict-out, like PyTorchModel
    logits = jax.block_until_ready(out["out"])

    ref = _reference(x, params)
    assert logits.shape == (N, NUM_CLASSES)
    assert jnp.allclose(logits, ref, atol=2e-3, rtol=2e-3), (
        "mismatch vs reference: max abs err = %e"
        % float(jnp.max(jnp.abs(logits - ref))))

    print("KERNEL_OK")
</pallas_src>

<mosaic_0001>
module attributes {stable_mosaic.version = 11 : i64} {
  func.func @_fused_conv_pool_linear_kernel(%arg0: i32, %arg1: i32, %arg2: memref<1x256x36xbf16, #tpu.memory_space<vmem>>, %arg3: memref<36x128xbf16, #tpu.memory_space<vmem>>, %arg4: memref<1x128xf32, #tpu.memory_space<vmem>>, %arg5: memref<128x128xf32, #tpu.memory_space<vmem>>, %arg6: memref<1x128xf32, #tpu.memory_space<vmem>>, %arg7: memref<1x8x128xf32, #tpu.memory_space<vmem>>, %arg8: memref<8x128xf32, #tpu.memory_space<vmem>>) attributes {dimension_semantics = [#tpu.dimension_semantics<parallel>, #tpu.dimension_semantics<arbitrary>], iteration_bounds = array<i64: 2, 1>, scalar_prefetch = 0 : i64, scratch_operands = 1 : i64, tpu.core_type = #tpu.core_type<tc>, window_params = [{transform_indices = @transform_0, window_bounds = array<i64: 1, 256, 36>}, {pipeline_mode = #tpu.pipeline_mode<synchronous>, transform_indices = @transform_1, window_bounds = array<i64: 36, 128>}, {pipeline_mode = #tpu.pipeline_mode<synchronous>, transform_indices = @transform_2, window_bounds = array<i64: 1, 128>}, {pipeline_mode = #tpu.pipeline_mode<synchronous>, transform_indices = @transform_3, window_bounds = array<i64: 128, 128>}, {pipeline_mode = #tpu.pipeline_mode<synchronous>, transform_indices = @transform_4, window_bounds = array<i64: 1, 128>}, {transform_indices = @transform_5, window_bounds = array<i64: 1, 8, 128>}]} {
    %c0_i32 = arith.constant 0 : i32
    %0 = arith.cmpi eq, %arg1, %c0_i32 : i32
    %1 = arith.extui %0 : i1 to i32
    %c0_i32_0 = arith.constant 0 : i32
    %2 = arith.cmpi ne, %1, %c0_i32_0 : i32
    scf.if %2 {
      %cst_15 = arith.constant 0.000000e+00 : f32
      %20 = vector.broadcast %cst_15 : f32 to vector<8x128xf32>
      %c0_16 = arith.constant 0 : index
      %c0_17 = arith.constant 0 : index
      %21 = vector.load %arg8[%c0_16, %c0_17] : memref<8x128xf32, #tpu.memory_space<vmem>>, vector<8x128xf32>
      tpu.vector_store %arg8[%c0_16, %c0_17], %20 {strides = array<i32>} : memref<8x128xf32, #tpu.memory_space<vmem>>, vector<8x128xf32>,
    } else {
    }
    %c0 = arith.constant 0 : index
    %c0_1 = arith.constant 0 : index
    %c0_2 = arith.constant 0 : index
    %3 = vector.load %arg2[%c0, %c0_1, %c0_2] : memref<1x256x36xbf16, #tpu.memory_space<vmem>>, vector<1x256x36xbf16>
    %4 = vector.shape_cast %3 : vector<1x256x36xbf16> to vector<256x36xbf16>
    %c0_3 = arith.constant 0 : index
    %c0_4 = arith.constant 0 : index
    %5 = vector.load %arg3[%c0_3, %c0_4] : memref<36x128xbf16, #tpu.memory_space<vmem>>, vector<36x128xbf16>
    %cst = arith.constant dense<0.000000e+00> : vector<256x128xf32>
    %6 = tpu.matmul %4, %5, %cst {dimension_numbers = #tpu.dot_dimension_numbers<[1], [0], [0], [1], [0, 0, 1, 1], [], []>} : vector<256x36xbf16>, vector<36x128xbf16>, vector<256x128xf32> -> vector<256x128xf32>
    %c0_5 = arith.constant 0 : index
    %c0_6 = arith.constant 0 : index
    %7 = vector.load %arg4[%c0_5, %c0_6] : memref<1x128xf32, #tpu.memory_space<vmem>>, vector<1x128xf32>
    %8 = vector.broadcast %7 : vector<1x128xf32> to vector<256x128xf32>
    %9 = arith.addf %6, %8 : vector<256x128xf32>
    %cst_7 = arith.constant 0.000000e+00 : f32
    %10 = vector.broadcast %cst_7 : f32 to vector<256x128xf32>
    %11 = arith.maximumf %9, %10 : vector<256x128xf32>
    %c0_8 = arith.constant 0 : index
    %c0_9 = arith.constant 0 : index
    %12 = vector.load %arg8[%c0_8, %c0_9] : memref<8x128xf32, #tpu.memory_space<vmem>>, vector<8x128xf32>
    %13 = vector.shape_cast %11 : vector<256x128xf32> to vector<32x8x128xf32>
    %cst_10 = arith.constant dense<0.000000e+00> : vector<8x128xf32>
    %14 = vector.multi_reduction <add>, %13, %cst_10 [0] : vector<32x8x128xf32> to vector<8x128xf32>
    %15 = arith.addf %12, %14 : vector<8x128xf32>
    %c0_11 = arith.constant 0 : index
    %c0_12 = arith.constant 0 : index
    %16 = vector.load %arg8[%c0_11, %c0_12] : memref<8x128xf32, #tpu.memory_space<vmem>>, vector<8x128xf32>
    tpu.vector_store %arg8[%c0_11, %c0_12], %15 {strides = array<i32>} : memref<8x128xf32, #tpu.memory_space<vmem>>, vector<8x128xf32>,
    %c0_i32_13 = arith.constant 0 : i32
    %17 = arith.cmpi eq, %arg1, %c0_i32_13 : i32
    %18 = arith.extui %17 : i1 to i32
    %c0_i32_14 = arith.constant 0 : i32
    %19 = arith.cmpi ne, %18, %c0_i32_14 : i32
    scf.if %19 {
      %c0_15 = arith.constant 0 : index
      %c0_16 = arith.constant 0 : index
      %20 = vector.load %arg8[%c0_15, %c0_16] : memref<8x128xf32, #tpu.memory_space<vmem>>, vector<8x128xf32>
      %c0_17 = arith.constant 0 : index
      %c0_18 = arith.constant 0 : index
      %21 = vector.load %arg5[%c0_17, %c0_18] : memref<128x128xf32, #tpu.memory_space<vmem>>, vector<128x128xf32>
      %cst_19 = arith.constant dense<0.000000e+00> : vector<8x128xf32>
      %22 = tpu.matmul %20, %21, %cst_19 {dimension_numbers = #tpu.dot_dimension_numbers<[1], [0], [0], [1], [0, 0, 1, 1], [], []>} : vector<8x128xf32>, vector<128x128xf32>, vector<8x128xf32> -> vector<8x128xf32>
      %cst_20 = arith.constant dense<0.000000e+00> : vector<128xf32>
      %23 = vector.multi_reduction <add>, %22, %cst_20 [0] : vector<8x128xf32> to vector<128xf32>
      %24 = vector.shape_cast %23 : vector<128xf32> to vector<1x128xf32>
      %c0_21 = arith.constant 0 : index
      %c0_22 = arith.constant 0 : index
      %25 = vector.load %arg6[%c0_21, %c0_22] : memref<1x128xf32, #tpu.memory_space<vmem>>, vector<1x128xf32>
      %26 = arith.addf %24, %25 : vector<1x128xf32>
      %27 = vector.shape_cast %26 : vector<1x128xf32> to vector<1x128xf32>
      %28 = vector.broadcast %27 : vector<1x128xf32> to vector<8x128xf32>
      %29 = vector.shape_cast %28 : vector<8x128xf32> to vector<1x8x128xf32>
      %c0_23 = arith.constant 0 : index
      %c0_24 = arith.constant 0 : index
      %c0_25 = arith.constant 0 : index
      %30 = vector.load %arg7[%c0_23, %c0_24, %c0_25] : memref<1x8x128xf32, #tpu.memory_space<vmem>>, vector<1x8x128xf32>
      tpu.vector_store %arg7[%c0_23, %c0_24, %c0_25], %29 {strides = array<i32>} : memref<1x8x128xf32, #tpu.memory_space<vmem>>, vector<1x8x128xf32>,
    } else {
    }
    return
  }
  func.func @transform_0(%arg0: i32, %arg1: i32) -> (i32, i32, i32) {
    %c0_i32 = arith.constant 0 : i32
    %c0_i32_0 = arith.constant 0 : i32
    return %arg0, %arg1, %c0_i32 : i32, i32, i32
  }
  func.func @transform_1(%arg0: i32, %arg1: i32) -> (i32, i32) {
    %c0_i32 = arith.constant 0 : i32
    %c0_i32_0 = arith.constant 0 : i32
    %c0_i32_1 = arith.constant 0 : i32
    return %c0_i32, %c0_i32_0 : i32, i32
  }
  func.func @transform_2(%arg0: i32, %arg1: i32) -> (i32, i32) {
    %c0_i32 = arith.constant 0 : i32
    %c0_i32_0 = arith.constant 0 : i32
    %c0_i32_1 = arith.constant 0 : i32
    return %c0_i32, %c0_i32_0 : i32, i32
  }
  func.func @transform_3(%arg0: i32, %arg1: i32) -> (i32, i32) {
    %c0_i32 = arith.constant 0 : i32
    %c0_i32_0 = arith.constant 0 : i32
    %c0_i32_1 = arith.constant 0 : i32
    return %c0_i32, %c0_i32_0 : i32, i32
  }
  func.func @transform_4(%arg0: i32, %arg1: i32) -> (i32, i32) {
    %c0_i32 = arith.constant 0 : i32
    %c0_i32_0 = arith.constant 0 : i32
    %c0_i32_1 = arith.constant 0 : i32
    return %c0_i32, %c0_i32_0 : i32, i32
  }
  func.func @transform_5(%arg0: i32, %arg1: i32) -> (i32, i32, i32) {
    %c0_i32 = arith.constant 0 : i32
    %c0_i32_0 = arith.constant 0 : i32
    %c0_i32_1 = arith.constant 0 : i32
    return %arg0, %c0_i32, %c0_i32_0 : i32, i32, i32
  }
}

</mosaic_0001>

<llo_original>
// kernel: fwd.1
$region0: #{fwd.1}
  #allocation0 [shape = 'u32[]', space=smem, size = 0x4, offset = 0x4, fixed_abs, tag = 'smem constant byte address 0x4 - core index']
  #allocation1 [shape = 'u32[144,128]{1,0:T(1,128)}', space=vmem, size = 0x12000, scoped, tag = 'internal scratch']
  #allocation2 [shape = 'f32[8,128]{1,0:T(8,128)}', space=vmem, size = 0x1000, scoped, tag = 'scratch operand']
  %s0 = inlined_call_operand.vmem [shape: bf16[2,256,36], index: 0, kind: input, shape index: {}]
  %s1 = inlined_call_operand.vmem [shape: bf16[36,128], index: 1, kind: input, shape index: {}]
  %s2 = inlined_call_operand.vmem [shape: f32[1,128], index: 2, kind: input, shape index: {}]
  %s3 = inlined_call_operand.vmem [shape: f32[128,128], index: 3, kind: input, shape index: {}]
  %s4 = inlined_call_operand.vmem [shape: f32[1,128], index: 4, kind: input, shape index: {}]
  %s5 = inlined_call_operand.vmem [shape: f32[2,8,128], index: 5, kind: output, shape index: {}]
  %s6 = sld [smem:[#allocation0]]
  $region61: #{fwd.1} parent=0
    _
  %s8 = ssub.s32 1, %s6
  %s9 = scalar_select 0, %s8, %s6
  loop: start=0, step=1, limit=4
  $region2: #{fwd.1} parent=0 // loop_pre_header
    _
  $region3: #{fwd.1} parent=0 // loop_header
    %s11 = sphi 0, %s15
    %p12 = scmp.ge.s32.totalorder %s11, 4
    %s18 = sphi 0, %s30
    %s19 = sphi 0, %s26
    %s20 = sphi 0, %s18
    %s21 = sphi 0, %s19
    %s22 = sphi 0, %s20
    %s23 = sphi 0, %s21
    %s35 = sphi 0, %s37
    %s38 = sphi 0, %s35
    %s39 = sphi 0, %s38
    %s55 = sphi 0, %s39
    %s59 = sphi 0, %s59
    %s61 = sphi 0, %s59
    %s62 = sphi 0, %s61
    %s76 = sphi 0, %s62
    %s80 = sphi 0, %s80
    %s82 = sphi 0, %s80
    %s83 = sphi 0, %s82
    %s97 = sphi 0, %s83
    %s101 = sphi 0, %s101
    %s103 = sphi 0, %s101
    %s104 = sphi 0, %s103
    %s118 = sphi 0, %s104
    %s122 = sphi 0, %s122
    %s124 = sphi 0, %s122
    %s125 = sphi 0, %s124
    %s139 = sphi 0, %s125
    %s145 = sphi 0, %s147
    %s148 = sphi 0, %s145
    %s149 = sphi 0, %s148
    %s165 = sphi 0, %s149
  $region4: #{fwd.1} parent=0 // loop_header_branch
    %14 = sbr.rel (%p12) target = $region8
  $region5: #{fwd.1} parent=0 // loop_body
    %s16 = ssub.s32 %s11, 1
    %s17 = ssub.s32 %s11, 2
    %s24 = sadd.s32 1, %s19
    %p25 = scmp.ge.s32.totalorder %s24, 1
    %s26 = scalar_select %p25, 0, %s24
    %s27 = sadd.s32 1, %s18
    %s28 = scalar_select %p25, %s27, %s18
    %p29 = scmp.ge.s32.totalorder %s28, 2
    %s30 = scalar_select %p29, 0, %s28
    %s31 = ssub.s32 %s18, %s30
    %s32 = ssub.s32 %s19, %s26
    %s33 = sor.u32 %s31, %s32
    %p34 = scmp.eq.s32.totalorder %s33, 0
    %s36 = sadd.s32 %s35, 1
    %s37 = scalar_select %p34, %s35, %s36
    %p40 = pneg %p34
    %p41 = scmp.eq.s32.totalorder %s11, 1
    %p42 = por %p40, %p41
    %p43 = scmp.ne.s32.totalorder %s35, %s38
    %p44 = scmp.eq.s32.totalorder %s11, 0
    %p45 = por %p43, %p44
    %p46 = scmp.ne.s32.totalorder %s35, %s38
    %p47 = scmp.eq.s32.totalorder %s16, 1
    %p48 = por %p46, %p47
    %p49 = scmp.ne.s32.totalorder %s38, %s39
    %p50 = scmp.eq.s32.totalorder %s16, 0
    %p51 = por %p49, %p50
    %p52 = scmp.ne.s32.totalorder %s38, %s39
    %p53 = scmp.eq.s32.totalorder %s17, 1
    %p54 = por %p52, %p53
    %p56 = scmp.ne.s32.totalorder %s39, %s55
    %p57 = scmp.eq.s32.totalorder %s17, 0
    %p58 = por %p56, %p57
    %s60 = sadd.s32 %s59, 1
    %p63 = scmp.eq.s32.totalorder %s11, 1
    %p64 = scmp.ne.s32.totalorder %s59, %s61
    %p65 = scmp.eq.s32.totalorder %s11, 0
    %p66 = por %p64, %p65
    %p67 = scmp.ne.s32.totalorder %s59, %s61
    %p68 = scmp.eq.s32.totalorder %s16, 1
    %p69 = por %p67, %p68
    %p70 = scmp.ne.s32.totalorder %s61, %s62
    %p71 = scmp.eq.s32.totalorder %s16, 0
    %p72 = por %p70, %p71
    %p73 = scmp.ne.s32.totalorder %s61, %s62
    %p74 = scmp.eq.s32.totalorder %s17, 1
    %p75 = por %p73, %p74
    %p77 = scmp.ne.s32.totalorder %s62, %s76
    %p78 = scmp.eq.s32.totalorder %s17, 0
    %p79 = por %p77, %p78
    %s81 = sadd.s32 %s80, 1
    %p84 = scmp.eq.s32.totalorder %s11, 1
    %p85 = scmp.ne.s32.totalorder %s80, %s82
    %p86 = scmp.eq.s32.totalorder %s11, 0
    %p87 = por %p85, %p86
    %p88 = scmp.ne.s32.totalorder %s80, %s82
    %p89 = scmp.eq.s32.totalorder %s16, 1
    %p90 = por %p88, %p89
    %p91 = scmp.ne.s32.totalorder %s82, %s83
    %p92 = scmp.eq.s32.totalorder %s16, 0
    %p93 = por %p91, %p92
    %p94 = scmp.ne.s32.totalorder %s82, %s83
    %p95 = scmp.eq.s32.totalorder %s17, 1
    %p96 = por %p94, %p95
    %p98 = scmp.ne.s32.totalorder %s83, %s97
    %p99 = scmp.eq.s32.totalorder %s17, 0
    %p100 = por %p98, %p99
    %s102 = sadd.s32 %s101, 1
    %p105 = scmp.eq.s32.totalorder %s11, 1
    %p106 = scmp.ne.s32.totalorder %s101, %s103
    %p107 = scmp.eq.s32.totalorder %s11, 0
    %p108 = por %p106, %p107
    %p109 = scmp.ne.s32.totalorder %s101, %s103
    %p110 = scmp.eq.s32.totalorder %s16, 1
    %p111 = por %p109, %p110
    %p112 = scmp.ne.s32.totalorder %s103, %s104
    %p113 = scmp.eq.s32.totalorder %s16, 0
    %p114 = por %p112, %p113
    %p115 = scmp.ne.s32.totalorder %s103, %s104
    %p116 = scmp.eq.s32.totalorder %s17, 1
    %p117 = por %p115, %p116
    %p119 = scmp.ne.s32.totalorder %s104, %s118
    %p120 = scmp.eq.s32.totalorder %s17, 0
    %p121 = por %p119, %p120
    %s123 = sadd.s32 %s122, 1
    %p126 = scmp.eq.s32.totalorder %s11, 1
    %p127 = scmp.ne.s32.totalorder %s122, %s124
    %p128 = scmp.eq.s32.totalorder %s11, 0
    %p129 = por %p127, %p128
    %p130 = scmp.ne.s32.totalorder %s122, %s124
    %p131 = scmp.eq.s32.totalorder %s16, 1
    %p132 = por %p130, %p131
    %p133 = scmp.ne.s32.totalorder %s124, %s125
    %p134 = scmp.eq.s32.totalorder %s16, 0
    %p135 = por %p133, %p134
    %p136 = scmp.ne.s32.totalorder %s124, %s125
    %p137 = scmp.eq.s32.totalorder %s17, 1
    %p138 = por %p136, %p137
    %p140 = scmp.ne.s32.totalorder %s125, %s139
    %p141 = scmp.eq.s32.totalorder %s17, 0
    %p142 = por %p140, %p141
    %s143 = ssub.s32 %s18, %s30
    %p144 = scmp.eq.s32.totalorder %s143, 0
    %s146 = sadd.s32 %s145, 1
    %s147 = scalar_select %p144, %s145, %s146
    %p150 = pneg %p144
    %p151 = scmp.eq.s32.totalorder %s11, 1
    %p152 = por %p150, %p151
    %p153 = scmp.ne.s32.totalorder %s145, %s148
    %p154 = scmp.eq.s32.totalorder %s11, 0
    %p155 = por %p153, %p154
    %p156 = scmp.ne.s32.totalorder %s145, %s148
    %p157 = scmp.eq.s32.totalorder %s16, 1
    %p158 = por %p156, %p157
    %p159 = scmp.ne.s32.totalorder %s148, %s149
    %p160 = scmp.eq.s32.totalorder %s16, 0
    %p161 = por %p159, %p160
    %p162 = scmp.ne.s32.totalorder %s148, %s149
    %p163 = scmp.eq.s32.totalorder %s17, 1
    %p164 = por %p162, %p163
    %p166 = scmp.ne.s32.totalorder %s149, %s165
    %p167 = scmp.eq.s32.totalorder %s17, 0
    %p168 = por %p166, %p167
    %p169 = scmp.le.s32.totalorder 1, %s11
    %p170 = scmp.lt.s32.totalorder %s11, 3
    %p171 = pnand %p169, %p170
    %p172 = pneg %p171
    // Predicated region
    $region9: #{fwd.1} parent=5 // pred_check
      _
    $region10: #{fwd.1} parent=5 // pred_check_branch
      %174 = sbr.rel (%p171) target = $region12
    $region11: #{fwd.1} parent=5 // pred_region
      %s175 = ssub.s32 %s11, 1
      // Predicated region
      $region13: #{fwd.1} parent=11 // pred_check
        %p176 = pneg %p72
      $region14: #{fwd.1} parent=11 // pred_check_branch
        %178 = sbr.rel (%p176) target = $region16
      $region15: #{fwd.1} parent=11 // pred_region
        _
      $region16: #{fwd.1} parent=11 // pred_fallthru
        _
      // Predicated region
      $region17: #{fwd.1} parent=11 // pred_check
        %p179 = pneg %p93
      $region18: #{fwd.1} parent=11 // pred_check_branch
        %181 = sbr.rel (%p179) target = $region20
      $region19: #{fwd.1} parent=11 // pred_region
        _
      $region20: #{fwd.1} parent=11 // pred_fallthru
        _
      // Predicated region
      $region21: #{fwd.1} parent=11 // pred_check
        %p182 = pneg %p114
      $region22: #{fwd.1} parent=11 // pred_check_branch
        %184 = sbr.rel (%p182) target = $region24
      $region23: #{fwd.1} parent=11 // pred_region
        _
      $region24: #{fwd.1} parent=11 // pred_fallthru
        _
      // Predicated region
      $region25: #{fwd.1} parent=11 // pred_check
        %p185 = pneg %p135
      $region26: #{fwd.1} parent=11 // pred_check_branch
        %187 = sbr.rel (%p185) target = $region28
      $region27: #{fwd.1} parent=11 // pred_region
        _
      $region28: #{fwd.1} parent=11 // pred_fallthru
        _
    $region12: #{fwd.1} parent=5 // pred_fallthru
      _
    %p188 = scmp.lt.s32.totalorder %s11, 2
    // Predicated region
    $region29: #{fwd.1} parent=5 // pred_check
      %p189 = pneg %p188
    $region30: #{fwd.1} parent=5 // pred_check_branch
      %191 = sbr.rel (%p189) target = $region32
    $region31: #{fwd.1} parent=5 // pred_region
      // Predicated region
      $region33: #{fwd.1} parent=31 // pred_check
        %p192 = pneg %p45
      $region34: #{fwd.1} parent=31 // pred_check_branch
        %194 = sbr.rel (%p192) target = $region36
      $region35: #{fwd.1} parent=31 // pred_region
        %s195 = smul.u32 32, %s19
        %p196 = scmp.lt.s32.totalorder %s18, 1
        %s197 = scalar_select %p196, %s18, 1
        %p198 = scmp.lt.s32.totalorder %s195, 31
        %s199 = scalar_select %p198, %s195, 31
        %s200 = smul.addr %s197, 32
        %s201 = sadd.s32 %s199, %s200
        %s202 = smul.addr %s201, 4
        %s203 = scalar_lea.vmem %s0, %s202
        %s204 = smul.u32 32, %s19
      $region36: #{fwd.1} parent=31 // pred_fallthru
        _
    $region32: #{fwd.1} parent=5 // pred_fallthru
      _
    %p205 = scmp.le.s32.totalorder 1, %s11
    %p206 = scmp.lt.s32.totalorder %s11, 3
    %p207 = pnand %p205, %p206
    %p208 = pneg %p207
    // Predicated region
    $region37: #{fwd.1} parent=5 // pred_check
      _
    $region38: #{fwd.1} parent=5 // pred_check_branch
      %210 = sbr.rel (%p207) target = $region40
    $region39: #{fwd.1} parent=5 // pred_region
      %s211 = ssub.s32 %s11, 1
      %s212 = smul.u32 32, %s21
      %p213 = scmp.lt.s32.totalorder %s20, 1
      %s214 = scalar_select %p213, %s20, 1
      %p215 = scmp.lt.s32.totalorder %s212, 31
      %s216 = scalar_select %p215, %s212, 31
      %s217 = smul.addr %s214, 32
      %s218 = sadd.s32 %s216, %s217
      %s219 = smul.addr %s218, 4
      %s220 = scalar_lea.vmem %s0, %s219
      %p221 = pneg %p51
      %p222 = pneg %p48
      %p223 = pneg %p72
      %p224 = pneg %p69
      %p225 = pneg %p93
      %p226 = pneg %p90
      %p227 = pneg %p114
      %p228 = pneg %p111
      %p229 = pneg %p135
      %p230 = pneg %p132
      %p231 = pneg %p161
      %p232 = pneg %p158
      %p233 = scmp.lt.s32.totalorder %s20, 1
      %s234 = scalar_select %p233, %s20, 1
      %s235 = smul.addr %s234, 8
      %s236 = scalar_lea.vmem %s5, %s235
      %s237 = smul.u32 32, %s21
      %p238 = scmp.lt.s32.totalorder %s20, 1
      %s239 = scalar_select %p238, %s20, 1
      %p240 = scmp.lt.s32.totalorder %s237, 31
      %s241 = scalar_select %p240, %s237, 31
      %s242 = smul.addr %s239, 32
      %s243 = sadd.s32 %s241, %s242
      %s244 = smul.addr %s243, 4
      %s245 = scalar_lea.vmem %s0, %s244
      %s246 = smul.u32 32, %s21
      %p247 = scmp.lt.s32.totalorder %s20, 1
      %s248 = scalar_select %p247, %s20, 1
      %s249 = smul.addr %s248, 8
      %s250 = scalar_lea.vmem %s5, %s249
      %p252 = scmp.eq.s32.totalorder %s21, 0
      // Predicated region
      $region41: #{fwd.1} parent=39 // pred_check
        %p253 = pneg %p252
      $region42: #{fwd.1} parent=39 // pred_check_branch
        %255 = sbr.rel (%p253) target = $region44
      $region43: #{fwd.1} parent=39 // pred_region
        %256 = vst [vmem:[#allocation2] sm:$0xff] 0.0
      $region44: #{fwd.1} parent=39 // pred_fallthru
        _
      %v257 = vld [vmem:[%s245] sm:$0xf]
      %v258 = vld [vmem:[%s245 + $0x4] sm:$0xf]
      %v259 = vld [vmem:[%s245 + $0x8] sm:$0xf]
      %v260 = vld [vmem:[%s245 + $0xc] sm:$0xf]
      %v261 = vld [vmem:[%s245 + $0x10] sm:$0xf]
      %v262 = vld [vmem:[%s245 + $0x14] sm:$0xf]
      %v263 = vld [vmem:[%s245 + $0x18] sm:$0xf]
      %v264 = vld [vmem:[%s245 + $0x1c] sm:$0xf]
      %v265 = vld [vmem:[%s245 + $0x20] sm:$0xf]
      %v266 = vld [vmem:[%s245 + $0x24] sm:$0xf]
      %v267 = vld [vmem:[%s245 + $0x28] sm:$0xf]
      %v268 = vld [vmem:[%s245 + $0x2c] sm:$0xf]
      %v269 = vld [vmem:[%s245 + $0x30] sm:$0xf]
      %v270 = vld [vmem:[%s245 + $0x34] sm:$0xf]
      %v271 = vld [vmem:[%s245 + $0x38] sm:$0xf]
      %v272 = vld [vmem:[%s245 + $0x3c] sm:$0xf]
      %v273 = vld [vmem:[%s245 + $0x40] sm:$0xf]
      %v274 = vld [vmem:[%s245 + $0x44] sm:$0xf]
      %v275 = vld [vmem:[%s245 + $0x48] sm:$0xf]
      %v276 = vld [vmem:[%s245 + $0x4c] sm:$0xf]
      %v277 = vld [vmem:[%s245 + $0x50] sm:$0xf]
      %v278 = vld [vmem:[%s245 + $0x54] sm:$0xf]
      %v279 = vld [vmem:[%s245 + $0x58] sm:$0xf]
      %v280 = vld [vmem:[%s245 + $0x5c] sm:$0xf]
      %v281 = vld [vmem:[%s245 + $0x60] sm:$0xf]
      %v282 = vld [vmem:[%s245 + $0x64] sm:$0xf]
      %v283 = vld [vmem:[%s245 + $0x68] sm:$0xf]
      %v284 = vld [vmem:[%s245 + $0x6c] sm:$0xf]
      %v285 = vld [vmem:[%s245 + $0x70] sm:$0xf]
      %v286 = vld [vmem:[%s245 + $0x74] sm:$0xf]
      %v287 = vld [vmem:[%s245 + $0x78] sm:$0xf]
      %v288 = vld [vmem:[%s245 + $0x7c] sm:$0xf]
      %v289 = vld [vmem:[%s1] sm:$0xf]
      %v290 = vld [vmem:[%s1 + $0x4] sm:$0xf]
      %v291 = vld [vmem:[%s1 + $0x8] sm:$0xf]
      %v292 = vld [vmem:[%s1 + $0xc] sm:$0xf]
      %v293 = vld [vmem:[%s1 + $0x10] sm:$0x3]
      %v294 = vld [vmem:[%s2] sm:$0x1]
      %v296 = vlaneseq
      %v297 = vshrl.u32 %v296, 7
      %v298 = vsub.s32 0, %v297
      %v299 = vrot.slane %v294, %v298
      %v333 = vunpack.c.l.b16 %v257
      %v334 = vunpack.c.l.b16 %v258
      %v335 = vunpack.c.l.b16 %v259
      %v336 = vunpack.c.l.b16 %v260
      %v337 = vunpack.c.l.b16 %v261
      %v338 = vunpack.c.l.b16 %v262
      %v339 = vunpack.c.l.b16 %v263
      %v340 = vunpack.c.l.b16 %v264
      %v341 = vunpack.c.l.b16 %v265
      %v342 = vunpack.c.l.b16 %v266
      %v343 = vunpack.c.l.b16 %v267
      %v344 = vunpack.c.l.b16 %v268
      %v345 = vunpack.c.l.b16 %v269
      %v346 = vunpack.c.l.b16 %v270
      %v347 = vunpack.c.l.b16 %v271
      %v348 = vunpack.c.l.b16 %v272
      %v349 = vunpack.c.l.b16 %v273
      %v350 = vunpack.c.l.b16 %v274
      %v351 = vunpack.c.l.b16 %v275
      %v352 = vunpack.c.l.b16 %v276
      %v353 = vunpack.c.l.b16 %v277
      %v354 = vunpack.c.l.b16 %v278
      %v355 = vunpack.c.l.b16 %v279
      %v356 = vunpack.c.l.b16 %v280
      %v357 = vunpack.c.l.b16 %v281
      %v358 = vunpack.c.l.b16 %v282
      %v359 = vunpack.c.l.b16 %v283
      %v360 = vunpack.c.l.b16 %v284
      %v361 = vunpack.c.l.b16 %v285
      %v362 = vunpack.c.l.b16 %v286
      %v363 = vunpack.c.l.b16 %v287
      %v364 = vunpack.c.l.b16 %v288
      %v365 = vpack.c.b16 %v334, %v333
      %v366 = vpack.c.b16 %v336, %v335
      %v367 = vpack.c.b16 %v338, %v337
      %v368 = vpack.c.b16 %v340, %v339
      %v369 = vpack.c.b16 %v342, %v341
      %v370 = vpack.c.b16 %v344, %v343
      %v371 = vpack.c.b16 %v346, %v345
      %v372 = vpack.c.b16 %v348, %v347
      %v373 = vpack.c.b16 %v350, %v349
      %v374 = vpack.c.b16 %v352, %v351
      %v375 = vpack.c.b16 %v354, %v353
      %v376 = vpack.c.b16 %v356, %v355
      %v377 = vpack.c.b16 %v358, %v357
      %v378 = vpack.c.b16 %v360, %v359
      %v379 = vpack.c.b16 %v362, %v361
      %v380 = vpack.c.b16 %v364, %v363
      %v386 = vunpack.c.l.b16 %v289
      %v387 = vunpack.c.l.b16 %v290
      %v388 = vunpack.c.l.b16 %v291
      %v389 = vunpack.c.l.b16 %v292
      %v390 = vunpack.c.l.b16 %v293
      %v391 = vpack.c.b16 %v387, %v386
      %v392 = vpack.c.b16 %v389, %v388
      %v393 = vpack.c.b16 %v390, %v390
      %vm396 = vcmask 293888
      %v398 = vsel %vm396, %v365, 0
      %v401 = vsel %vm396, %v366, 0
      %v404 = vsel %vm396, %v367, 0
      %v407 = vsel %vm396, %v368, 0
      %v410 = vsel %vm396, %v369, 0
      %v413 = vsel %vm396, %v370, 0
      %v416 = vsel %vm396, %v371, 0
      %v419 = vsel %vm396, %v372, 0
      %v422 = vsel %vm396, %v373, 0
      %v425 = vsel %vm396, %v374, 0
      %v428 = vsel %vm396, %v375, 0
      %v431 = vsel %vm396, %v376, 0
      %v434 = vsel %vm396, %v377, 0
      %v437 = vsel %vm396, %v378, 0
      %v440 = vsel %vm396, %v379, 0
      %v443 = vsel %vm396, %v380, 0
      %vm445 = vcmask 1041408
      %v447 = vsel %vm445, %v393, 0
      %449 = vmatprep.subr.bf16.mxu0 0
      %450 = vmatpush1.bf16.msra.mxu0 0
      %451 = vmatprep.subr.bf16.mxu0 0
      %452 = vmatpush1.bf16.msra.mxu0 0
      %453 = vmatprep.subr.bf16.mxu0 0
      %454 = vmatpush1.bf16.msra.mxu0 0
      %455 = vmatprep.subr.bf16.mxu0 0
      %456 = vmatpush1.bf16.msra.mxu0 0
      %457 = vmatprep.subr.bf16.mxu0 0
      %458 = vmatpush1.bf16.msra.mxu0 0
      %459 = vmatprep.subr.bf16.mxu0 0
      %460 = vmatpush1.bf16.msra.mxu0 %v447
      %461 = vmatprep.subr.bf16.mxu0 0
      %462 = vmatpush1.bf16.msra.mxu0 %v392
      %463 = vmatprep.subr.bf16.mxu0 0
      %464 = vmatpush1.bf16.msra.mxu0 %v391
      %465 = vmatprep.subr.bf16.mxu0 0
      %466 = vmatpush2.bf16.msra.mxu0 0
      %467 = vmatprep.subr.bf16.mxu0 0
      %468 = vmatpush2.bf16.msra.mxu0 0
      %469 = vmatprep.subr.bf16.mxu0 0
      %470 = vmatpush2.bf16.msra.mxu0 0
      %471 = vmatprep.subr.bf16.mxu0 0
      %472 = vmatpush2.bf16.msra.mxu0 0
      %473 = vmatprep.subr.bf16.mxu0 0
      %474 = vmatpush2.bf16.msra.mxu0 0
      %475 = vmatprep.subr.bf16.mxu0 0
      %476 = vmatpush2.bf16.msra.mxu0 0
      %477 = vmatprep.subr.bf16.mxu0 0
      %478 = vmatpush2.bf16.msra.mxu0 0
      %479 = vmatprep.subr.bf16.mxu0 0
      %480 = vmatpush2.bf16.msra.mxu0 0
      %481 = vmatprep.mubr.bf16.mxu0 0
      %482 = vmatmul.mubr.bf16.gmra.mxu0 %v398
      %v483 = vpop.f32.mrf.mxu0
      %v484 = vadd.f32 %v299, %v483
      %v485 = vpop.f32.mrf.mxu0
      %v486 = vpop.f32.mrf.mxu0
      %v487 = vadd.f32 %v299, %v486
      %v488 = vpop.f32.mrf.mxu0
      %489 = vmatprep.mubr.bf16.mxu0 0
      %490 = vmatmul.mubr.bf16.gmra.mxu0 %v401
      %v491 = vpop.f32.mrf.mxu0
      %v492 = vadd.f32 %v299, %v491
      %v493 = vpop.f32.mrf.mxu0
      %v494 = vpop.f32.mrf.mxu0
      %v495 = vadd.f32 %v299, %v494
      %v496 = vpop.f32.mrf.mxu0
      %497 = vmatprep.mubr.bf16.mxu0 0
      %498 = vmatmul.mubr.bf16.gmra.mxu0 %v404
      %v499 = vpop.f32.mrf.mxu0
      %v500 = vadd.f32 %v299, %v499
      %v501 = vpop.f32.mrf.mxu0
      %v502 = vpop.f32.mrf.mxu0
      %v503 = vadd.f32 %v299, %v502
      %v504 = vpop.f32.mrf.mxu0
      %505 = vmatprep.mubr.bf16.mxu0 0
      %506 = vmatmul.mubr.bf16.gmra.mxu0 %v407
      %v507 = vpop.f32.mrf.mxu0
      %v508 = vadd.f32 %v299, %v507
      %v509 = vpop.f32.mrf.mxu0
      %v510 = vpop.f32.mrf.mxu0
      %v511 = vadd.f32 %v299, %v510
      %v512 = vpop.f32.mrf.mxu0
      %513 = vmatprep.mubr.bf16.mxu0 0
      %514 = vmatmul.mubr.bf16.gmra.mxu0 %v410
      %v515 = vpop.f32.mrf.mxu0
      %v516 = vadd.f32 %v299, %v515
      %v517 = vpop.f32.mrf.mxu0
      %v518 = vpop.f32.mrf.mxu0
      %v519 = vadd.f32 %v299, %v518
      %v520 = vpop.f32.mrf.mxu0
      %521 = vmatprep.mubr.bf16.mxu0 0
      %522 = vmatmul.mubr.bf16.gmra.mxu0 %v413
      %v523 = vpop.f32.mrf.mxu0
      %v524 = vadd.f32 %v299, %v523
      %v525 = vpop.f32.mrf.mxu0
      %v526 = vpop.f32.mrf.mxu0
      %v527 = vadd.f32 %v299, %v526
      %v528 = vpop.f32.mrf.mxu0
      %529 = vmatprep.mubr.bf16.mxu0 0
      %530 = vmatmul.mubr.bf16.gmra.mxu0 %v416
      %v531 = vpop.f32.mrf.mxu0
      %v532 = vadd.f32 %v299, %v531
      %v533 = vpop.f32.mrf.mxu0
      %v534 = vpop.f32.mrf.mxu0
      %v535 = vadd.f32 %v299, %v534
      %v536 = vpop.f32.mrf.mxu0
      %537 = vmatprep.mubr.bf16.mxu0 0
      %538 = vmatmul.mubr.bf16.gmra.mxu0 %v419
      %v539 = vpop.f32.mrf.mxu0
      %v540 = vadd.f32 %v299, %v539
      %v541 = vpop.f32.mrf.mxu0
      %v542 = vpop.f32.mrf.mxu0
      %v543 = vadd.f32 %v299, %v542
      %v544 = vpop.f32.mrf.mxu0
      %545 = vmatprep.mubr.bf16.mxu0 0
      %546 = vmatmul.mubr.bf16.gmra.mxu0 %v422
      %v547 = vpop.f32.mrf.mxu0
      %v548 = vadd.f32 %v299, %v547
      %v549 = vpop.f32.mrf.mxu0
      %v550 = vpop.f32.mrf.mxu0
      %v551 = vadd.f32 %v299, %v550
      %v552 = vpop.f32.mrf.mxu0
      %553 = vmatprep.mubr.bf16.mxu0 0
      %554 = vmatmul.mubr.bf16.gmra.mxu0 %v425
      %v555 = vpop.f32.mrf.mxu0
      %v556 = vadd.f32 %v299, %v555
      %v557 = vpop.f32.mrf.mxu0
      %v558 = vpop.f32.mrf.mxu0
      %v559 = vadd.f32 %v299, %v558
      %v560 = vpop.f32.mrf.mxu0
      %561 = vmatprep.mubr.bf16.mxu0 0
      %562 = vmatmul.mubr.bf16.gmra.mxu0 %v428
      %v563 = vpop.f32.mrf.mxu0
      %v564 = vadd.f32 %v299, %v563
      %v565 = vpop.f32.mrf.mxu0
      %v566 = vpop.f32.mrf.mxu0
      %v567 = vadd.f32 %v299, %v566
      %v568 = vpop.f32.mrf.mxu0
      %569 = vmatprep.mubr.bf16.mxu0 0
      %570 = vmatmul.mubr.bf16.gmra.mxu0 %v431
      %v571 = vpop.f32.mrf.mxu0
      %v572 = vadd.f32 %v299, %v571
      %v573 = vpop.f32.mrf.mxu0
      %v574 = vpop.f32.mrf.mxu0
      %v575 = vadd.f32 %v299, %v574
      %v576 = vpop.f32.mrf.mxu0
      %577 = vmatprep.mubr.bf16.mxu0 0
      %578 = vmatmul.mubr.bf16.gmra.mxu0 %v434
      %v579 = vpop.f32.mrf.mxu0
      %v580 = vadd.f32 %v299, %v579
      %v581 = vpop.f32.mrf.mxu0
      %v582 = vpop.f32.mrf.mxu0
      %v583 = vadd.f32 %v299, %v582
      %v584 = vpop.f32.mrf.mxu0
      %585 = vmatprep.mubr.bf16.mxu0 0
      %586 = vmatmul.mubr.bf16.gmra.mxu0 %v437
      %v587 = vpop.f32.mrf.mxu0
      %v588 = vadd.f32 %v299, %v587
      %v589 = vpop.f32.mrf.mxu0
      %v590 = vpop.f32.mrf.mxu0
      %v591 = vadd.f32 %v299, %v590
      %v592 = vpop.f32.mrf.mxu0
      %593 = vmatprep.mubr.bf16.mxu0 0
      %594 = vmatmul.mubr.bf16.gmra.mxu0 %v440
      %v595 = vpop.f32.mrf.mxu0
      %v596 = vadd.f32 %v299, %v595
      %v597 = vpop.f32.mrf.mxu0
      %v598 = vpop.f32.mrf.mxu0
      %v599 = vadd.f32 %v299, %v598
      %v600 = vpop.f32.mrf.mxu0
      %601 = vmatprep.mubr.bf16.mxu0 0
      %602 = vmatmul.mubr.bf16.gmra.mxu0 %v443
      %v603 = vpop.f32.mrf.mxu0
      %v604 = vadd.f32 %v299, %v603
      %v605 = vpop.f32.mrf.mxu0
      %v606 = vpop.f32.mrf.mxu0
      %v607 = vadd.f32 %v299, %v606
      %v608 = vpop.f32.mrf.mxu0
      %609 = vdwg.mxu0
      %v610 = vmax.f32 %v484, 0.0
      %v611 = vmax.f32 %v487, 0.0
      %v612 = vmax.f32 %v492, 0.0
      %v613 = vmax.f32 %v495, 0.0
      %v614 = vmax.f32 %v500, 0.0
      %v615 = vmax.f32 %v503, 0.0
      %v616 = vmax.f32 %v508, 0.0
      %v617 = vmax.f32 %v511, 0.0
      %v618 = vmax.f32 %v516, 0.0
      %v619 = vmax.f32 %v519, 0.0
      %v620 = vmax.f32 %v524, 0.0
      %v621 = vmax.f32 %v527, 0.0
      %v622 = vmax.f32 %v532, 0.0
      %v623 = vmax.f32 %v535, 0.0
      %v624 = vmax.f32 %v540, 0.0
      %v625 = vmax.f32 %v543, 0.0
      %v626 = vmax.f32 %v548, 0.0
      %v627 = vmax.f32 %v551, 0.0
      %v628 = vmax.f32 %v556, 0.0
      %v629 = vmax.f32 %v559, 0.0
      %v630 = vmax.f32 %v564, 0.0
      %v631 = vmax.f32 %v567, 0.0
      %v632 = vmax.f32 %v572, 0.0
      %v633 = vmax.f32 %v575, 0.0
      %v634 = vmax.f32 %v580, 0.0
      %v635 = vmax.f32 %v583, 0.0
      %v636 = vmax.f32 %v588, 0.0
      %v637 = vmax.f32 %v591, 0.0
      %v638 = vmax.f32 %v596, 0.0
      %v639 = vmax.f32 %v599, 0.0
      %v640 = vmax.f32 %v604, 0.0
      %v641 = vmax.f32 %v607, 0.0
      %v642 = vld [vmem:[#allocation2] sm:$0xff]
      %v643 = vadd.f32 %v610, %v611
      %v644 = vadd.f32 %v643, %v612
      %v645 = vadd.f32 %v644, %v613
      %v646 = vadd.f32 %v645, %v614
      %v647 = vadd.f32 %v646, %v615
      %v648 = vadd.f32 %v647, %v616
      %v649 = vadd.f32 %v648, %v617
      %v650 = vadd.f32 %v649, %v618
      %v651 = vadd.f32 %v650, %v619
      %v652 = vadd.f32 %v651, %v620
      %v653 = vadd.f32 %v652, %v621
      %v654 = vadd.f32 %v653, %v622
      %v655 = vadd.f32 %v654, %v623
      %v656 = vadd.f32 %v655, %v624
      %v657 = vadd.f32 %v656, %v625
      %v658 = vadd.f32 %v657, %v626
      %v659 = vadd.f32 %v658, %v627
      %v660 = vadd.f32 %v659, %v628
      %v661 = vadd.f32 %v660, %v629
      %v662 = vadd.f32 %v661, %v630
      %v663 = vadd.f32 %v662, %v631
      %v664 = vadd.f32 %v663, %v632
      %v665 = vadd.f32 %v664, %v633
      %v666 = vadd.f32 %v665, %v634
      %v667 = vadd.f32 %v666, %v635
      %v668 = vadd.f32 %v667, %v636
      %v669 = vadd.f32 %v668, %v637
      %v670 = vadd.f32 %v669, %v638
      %v671 = vadd.f32 %v670, %v639
      %v672 = vadd.f32 %v671, %v640
      %v673 = vadd.f32 %v672, %v641
      %v674 = vadd.f32 %v642, %v673
      %675 = vst [vmem:[#allocation2] sm:$0xff] %v674
      // Predicated region
      $region45: #{fwd.1} parent=39 // pred_check
        %p676 = pneg %p252
      $region46: #{fwd.1} parent=39 // pred_check_branch
        %678 = sbr.rel (%p676) target = $region48
      $region47: #{fwd.1} parent=39 // pred_region
        %v679 = vld [vmem:[#allocation2] sm:$0xff]
        %v680 = vld [vmem:[%s3] sm:$0xff]
        %v681 = vld [vmem:[%s3 + $0x8] sm:$0xff]
        %v682 = vld [vmem:[%s3 + $0x10] sm:$0xff]
        %v683 = vld [vmem:[%s3 + $0x18] sm:$0xff]
        %v684 = vld [vmem:[%s3 + $0x20] sm:$0xff]
        %v685 = vld [vmem:[%s3 + $0x28] sm:$0xff]
        %v686 = vld [vmem:[%s3 + $0x30] sm:$0xff]
        %v687 = vld [vmem:[%s3 + $0x38] sm:$0xff]
        %v688 = vld [vmem:[%s3 + $0x40] sm:$0xff]
        %v689 = vld [vmem:[%s3 + $0x48] sm:$0xff]
        %v690 = vld [vmem:[%s3 + $0x50] sm:$0xff]
        %v691 = vld [vmem:[%s3 + $0x58] sm:$0xff]
        %v692 = vld [vmem:[%s3 + $0x60] sm:$0xff]
        %v693 = vld [vmem:[%s3 + $0x68] sm:$0xff]
        %v694 = vld [vmem:[%s3 + $0x70] sm:$0xff]
        %v695 = vld [vmem:[%s3 + $0x78] sm:$0xff]
        %696 = vmatprep.subr.mxu0 0.0
        %697 = vmatpush1.msra.mxu0 %v695
        %698 = vmatprep.subr.mxu0 0.0
        %699 = vmatpush1.msra.mxu0 %v694
        %700 = vmatprep.subr.mxu0 0.0
        %701 = vmatpush1.msra.mxu0 %v693
        %702 = vmatprep.subr.mxu0 0.0
        %703 = vmatpush1.msra.mxu0 %v692
        %704 = vmatprep.subr.mxu0 0.0
        %705 = vmatpush1.msra.mxu0 %v691
        %706 = vmatprep.subr.mxu0 0.0
        %707 = vmatpush1.msra.mxu0 %v690
        %708 = vmatprep.subr.mxu0 0.0
        %709 = vmatpush1.msra.mxu0 %v689
        %710 = vmatprep.subr.mxu0 0.0
        %711 = vmatpush1.msra.mxu0 %v688
        %712 = vmatprep.subr.mxu0 0.0
        %713 = vmatpush1.msra.mxu0 %v687
        %714 = vmatprep.subr.mxu0 0.0
        %715 = vmatpush1.msra.mxu0 %v686
        %716 = vmatprep.subr.mxu0 0.0
        %717 = vmatpush1.msra.mxu0 %v685
        %718 = vmatprep.subr.mxu0 0.0
        %719 = vmatpush1.msra.mxu0 %v684
        %720 = vmatprep.subr.mxu0 0.0
        %721 = vmatpush1.msra.mxu0 %v683
        %722 = vmatprep.subr.mxu0 0.0
        %723 = vmatpush1.msra.mxu0 %v682
        %724 = vmatprep.subr.mxu0 0.0
        %725 = vmatpush1.msra.mxu0 %v681
        %726 = vmatprep.subr.mxu0 0.0
        %727 = vmatpush1.msra.mxu0 %v680
        %728 = vmatprep.subr.mxu0 0.0
        %729 = vmatpush2.msra.mxu0 0.0
        %730 = vmatprep.subr.mxu0 0.0
        %731 = vmatpush2.msra.mxu0 0.0
        %732 = vmatprep.subr.mxu0 0.0
        %733 = vmatpush2.msra.mxu0 0.0
        %734 = vmatprep.subr.mxu0 0.0
        %735 = vmatpush2.msra.mxu0 0.0
        %736 = vmatprep.subr.mxu0 0.0
        %737 = vmatpush2.msra.mxu0 0.0
        %738 = vmatprep.subr.mxu0 0.0
        %739 = vmatpush2.msra.mxu0 0.0
        %740 = vmatprep.subr.mxu0 0.0
        %741 = vmatpush2.msra.mxu0 0.0
        %742 = vmatprep.subr.mxu0 0.0
        %743 = vmatpush2.msra.mxu0 0.0
        %744 = vmatprep.subr.mxu0 0.0
        %745 = vmatpush2.msra.mxu0 0.0
        %746 = vmatprep.subr.mxu0 0.0
        %747 = vmatpush2.msra.mxu0 0.0
        %748 = vmatprep.subr.mxu0 0.0
        %749 = vmatpush2.msra.mxu0 0.0
        %750 = vmatprep.subr.mxu0 0.0
        %751 = vmatpush2.msra.mxu0 0.0
        %752 = vmatprep.subr.mxu0 0.0
        %753 = vmatpush2.msra.mxu0 0.0
        %754 = vmatprep.subr.mxu0 0.0
        %755 = vmatpush2.msra.mxu0 0.0
        %756 = vmatprep.subr.mxu0 0.0
        %757 = vmatpush2.msra.mxu0 0.0
        %758 = vmatprep.subr.mxu0 0.0
        %759 = vmatpush2.msra.mxu0 0.0
        %760 = vmatprep.mubr.f32.mxu0 0.0
        %761 = vmatmul.mubr.f32.gmra.mxu0 %v679
        %v762 = vpop.f32.mrf.mxu0
        %v763 = vadd.f32 0.0, %v762
        %v764 = vpop.f32.mrf.mxu0
        %765 = vdwg.mxu0
        %v766 = vrot.slane %v763, 4
        %v767 = vadd.f32 %v763, %v766
        %v768 = vrot.slane %v767, 2
        %v769 = vadd.f32 %v767, %v768
        %v770 = vrot.slane %v769, 1
        %v771 = vadd.f32 %v769, %v770
        %v772 = vld [vmem:[%s4] sm:$0x1]
        %v773 = vadd.f32 %v771, %v772
        %v774 = vlaneseq
        %v775 = vshrl.u32 %v774, 7
        %v776 = vsub.s32 0, %v775
        %v777 = vrot.slane %v773, %v776
        %778 = vst [vmem:[%s250] sm:$0xff] %v777
      $region48: #{fwd.1} parent=39 // pred_fallthru
        _
      %p779 = scmp.lt.s32.totalorder %s20, 1
      %s780 = scalar_select %p779, %s20, 1
      %s781 = smul.addr %s780, 8
      %s782 = scalar_lea.vmem %s5, %s781
      // Predicated region
      $region49: #{fwd.1} parent=39 // pred_check
        %p783 = pneg %p158
      $region50: #{fwd.1} parent=39 // pred_check_branch
        %785 = sbr.rel (%p783) target = $region52
      $region51: #{fwd.1} parent=39 // pred_region
        _
      $region52: #{fwd.1} parent=39 // pred_fallthru
        _
    $region40: #{fwd.1} parent=5 // pred_fallthru
      _
    %p786 = scmp.le.s32.totalorder 2, %s11
    // Predicated region
    $region53: #{fwd.1} parent=5 // pred_check
      %p787 = pneg %p786
    $region54: #{fwd.1} parent=5 // pred_check_branch
      %789 = sbr.rel (%p787) target = $region56
    $region55: #{fwd.1} parent=5 // pred_region
      %s790 = ssub.s32 %s11, 2
      // Predicated region
      $region57: #{fwd.1} parent=55 // pred_check
        %p791 = pneg %p164
      $region58: #{fwd.1} parent=55 // pred_check_branch
        %793 = sbr.rel (%p791) target = $region60
      $region59: #{fwd.1} parent=55 // pred_region
        %p794 = scmp.lt.s32.totalorder %s22, 1
        %s795 = scalar_select %p794, %s22, 1
        %s796 = smul.addr %s795, 8
        %s797 = scalar_lea.vmem %s5, %s796
      $region60: #{fwd.1} parent=55 // pred_fallthru
        _
    $region56: #{fwd.1} parent=5 // pred_fallthru
      _
  $region6: #{fwd.1} parent=0 // loop_footer
    %s15 = sadd.s32 1, %s11
  $region7: #{fwd.1} parent=0 // loop_footer_branch
    %10 = sbr.rel target = $region3
  $region8: #{fwd.1} parent=0 // loop_exit
    _

</llo_original>
